<compile_context>
chip_gen: v6e
topology: v6e:2x2x1
jax: 0.10.0
libtpu: 0.0.40
codegen_flags: <defaults>
</compile_context>

<pallas_src>
import functools

import jax
import jax.numpy as jnp
from jax import lax
from jax.experimental import pallas as pl
from jax.experimental.pallas import tpu as pltpu

LANES = 128                     # vreg lane width
MAX_TILE_ROWS = 8192            # 8192 x 128 x 4B = 4 MiB per f32 input block
CHUNK_ROWS = 512                # in-kernel sub-chunk (bounds temporaries)
VMEM_LIMIT = 40 * 1024 * 1024   # fits 2 x 2 x 4 MiB streams + chunk temps everywhere
PAD_LOGIT = -100.0              # sentinel: sigmoid ~ 0, bce ~ 0, focal ~ 0


def _round_up(x, m):
    return ((x + m - 1) // m) * m


def _dice_focal_partial_kernel(p_ref, t_ref, o_ref, *, alpha, gamma,
                               valid_rows, tile_rows, chunk_rows):
    """Accumulate four partial sums over one (tile_rows, 128) block.

    o_ref (VMEM, block (4, 8, 128), resident across the whole grid):
      [0] sum(sigmoid(p) * t)   (dice intersection)
      [1] sum(sigmoid(p))
      [2] sum(t)
      [3] sum(focal term)
    """
    j = pl.program_id(0)

    @pl.when(j == 0)
    def _init():
        o_ref[...] = jnp.zeros_like(o_ref)

    num_chunks = tile_rows // chunk_rows              # static python int
    row_base = j * tile_rows                          # global row offset of block
    row_iota = lax.broadcasted_iota(jnp.int32, (chunk_rows, LANES), 0)

    g = float(gamma)

    def chunk_body(c, carry):
        acc_it, acc_s, acc_t, acc_f = carry
        if isinstance(c, int):
            start = c * chunk_rows                    # static (single-chunk case)
        else:
            start = pl.multiple_of(c * chunk_rows, chunk_rows)

        p = p_ref[pl.ds(start, chunk_rows), :].astype(jnp.float32)
        t = t_ref[pl.ds(start, chunk_rows), :].astype(jnp.float32)

        # Mask rows past the logical array (partial last block).  Masking the
        # INPUTS (select, not multiply) also neutralizes any NaN garbage in the
        # DMA-padded region of the VMEM block.
        valid = (row_base + c * chunk_rows + row_iota) < valid_rows
        p = jnp.where(valid, p, PAD_LOGIT)
        t = jnp.where(valid, t, 0.0)

        sig = jax.nn.sigmoid(p)

        # Stable BCE-with-logits, reusing sig:
        #   log1p(exp(-|p|)) == -log(sigmoid(|p|)) == -log(max(sig, 1 - sig))
        # argument >= 0.5 -> always well conditioned; 2 EUP ops / element total.
        bce = jnp.maximum(p, 0.0) - p * t - jnp.log(jnp.maximum(sig, 1.0 - sig))

        # pt = exp(-bce) == sig*t + (1-sig)*(1-t) exactly for hard {0,1} targets.
        pt = sig * t + (1.0 - sig) * (1.0 - t)
        one_m_pt = 1.0 - pt

        if g.is_integer() and 0 <= int(g) <= 4:
            gi = int(g)
            if gi == 0:
                mod = jnp.ones_like(one_m_pt)
            else:
                mod = one_m_pt
                for _ in range(gi - 1):
                    mod = mod * one_m_pt              # gamma=2 -> one VPU square
        else:
            mod = one_m_pt ** g                       # non-integer gamma fallback

        focal = alpha * mod * bce

        def fold(x):
            # (chunk, 128) -> (chunk//8, 8, 128) -> (8, 128): pure vreg adds.
            return jnp.sum(x.reshape(-1, 8, LANES), axis=0)

        return (acc_it + fold(sig * t), acc_s + fold(sig),
                acc_t + fold(t), acc_f + fold(focal))

    zero = jnp.zeros((8, LANES), jnp.float32)
    init = (zero, zero, zero, zero)
    if num_chunks == 1:
        acc_it, acc_s, acc_t, acc_f = chunk_body(0, init)
    else:
        acc_it, acc_s, acc_t, acc_f = lax.fori_loop(0, num_chunks,
                                                    chunk_body, init)

    o_ref[0] += acc_it
    o_ref[1] += acc_s
    o_ref[2] += acc_t
    o_ref[3] += acc_f


def dice_focal_loss(p, t, *, smooth=1.0, alpha=0.8, gamma=2.0,
                    w_dice=0.5, w_focal=0.5):
    """Pallas TPU implementation of DiceFocalLoss.forward(p, t) -> scalar f32."""
    assert p.shape == t.shape
    n = p.size

    # Keep the target stream in its original (narrow) dtype; upcast in-kernel.
    # Only bools are widened to int8 (still 1 B/elem) for Mosaic-friendly loads.
    if t.dtype == jnp.bool_:
        t = t.astype(jnp.int8)

    pf = p.reshape(-1)
    tf = t.reshape(-1)

    def _sub_align(dt):
        # sublane alignment for packed dtypes: 8 (4B), 16 (2B), 32 (1B)
        return 8 * max(1, 4 // jnp.dtype(dt).itemsize)
    sub_align = max(_sub_align(pf.dtype), _sub_align(tf.dtype))

    rows0 = pl.cdiv(n, LANES)             # rows of the logical (rows, 128) view
    lane_pad = rows0 * LANES - n          # 0..127

    if rows0 > CHUNK_ROWS:
        # Large input: block rounded DOWN to a multiple of CHUNK_ROWS so it
        # never exceeds the array extent and no padding copy of the big
        # streams is needed; the partial last block is masked in-kernel.
        tile_rows = min(MAX_TILE_ROWS, (rows0 // CHUNK_ROWS) * CHUNK_ROWS)
        chunk_rows = CHUNK_ROWS
        row_pad = 0
    else:
        # Small input: single block, padded (tiny copy) up to sublane alignment.
        tile_rows = _round_up(rows0, sub_align)
        chunk_rows = tile_rows
        row_pad = tile_rows - rows0

    pad = lane_pad + row_pad * LANES
    if pad:
        # TODO(synk): for LARGE inputs with n % 128 != 0 this still copies the
        # whole stream once; splitting off a <128-element tail would avoid it.
        pf = jnp.pad(pf, (0, pad), constant_values=PAD_LOGIT)
        tf = jnp.pad(tf, (0, pad), constant_values=0)

    rows = rows0 + row_pad
    P = pf.reshape(rows, LANES)           # contiguous reshape: no copy
    T = tf.reshape(rows, LANES)

    steps = pl.cdiv(rows, tile_rows)

    kernel = functools.partial(
        _dice_focal_partial_kernel,
        alpha=float(alpha), gamma=float(gamma),
        valid_rows=rows, tile_rows=tile_rows, chunk_rows=chunk_rows)

    in_spec_p = pl.BlockSpec((tile_rows, LANES), lambda j: (j, 0))
    in_spec_t = pl.BlockSpec((tile_rows, LANES), lambda j: (j, 0))
    out_spec = pl.BlockSpec((4, 8, LANES), lambda j: (0, 0, 0))

    bytes_accessed = (P.size * P.dtype.itemsize + T.size * T.dtype.itemsize
                      + 4 * 8 * LANES * 4)
    cost = pl.CostEstimate(flops=22 * P.size,
                           transcendentals=2 * P.size,
                           bytes_accessed=bytes_accessed)

    partials = pl.pallas_call(
        kernel,
        out_shape=jax.ShapeDtypeStruct((4, 8, LANES), jnp.float32),
        grid_spec=pltpu.PrefetchScalarGridSpec(
            num_scalar_prefetch=0,
            grid=(steps,),
            in_specs=[in_spec_p, in_spec_t],
            out_specs=out_spec,
        ),
        compiler_params=pltpu.CompilerParams(
            dimension_semantics=("arbitrary",),
            vmem_limit_bytes=VMEM_LIMIT),
        cost_estimate=cost,
    )(P, T)

    # Tiny final reduction + dice/focal combine (a few hundred floats).
    sums = jnp.sum(partials, axis=(1, 2))        # (4,)
    inter, sig_sum, t_sum, focal_sum = sums[0], sums[1], sums[2], sums[3]

    dice_loss = 1.0 - (2.0 * inter + smooth) / (sig_sum + t_sum + smooth)
    focal_loss = focal_sum / n                   # mean over the true element count
    return w_dice * dice_loss + w_focal * focal_loss


def _reference_loss(p, t, *, smooth=1.0, alpha=0.8, gamma=2.0,
                    w_dice=0.5, w_focal=0.5):
    p = p.astype(jnp.float32)
    t = t.astype(jnp.float32)
    sig = jax.nn.sigmoid(p).reshape(-1)
    tt = t.reshape(-1)
    inter = jnp.sum(sig * tt)
    dice = 1.0 - (2.0 * inter + smooth) / (jnp.sum(sig) + jnp.sum(tt) + smooth)
    bce = jnp.maximum(p, 0.0) - p * t + jnp.log1p(jnp.exp(-jnp.abs(p)))
    pt = jnp.exp(-bce)
    focal = jnp.mean(alpha * (1.0 - pt) ** gamma * bce)
    return w_dice * dice + w_focal * focal


if __name__ == "__main__":
    key = jax.random.PRNGKey(0)
    k1, k2 = jax.random.split(key)

    # NCHW logits and binary targets, small shapes.
    B, C, H, W = 2, 4, 16, 16
    p = jax.random.normal(k1, (B, C, H, W), dtype=jnp.float32) * 2.0
    t = jax.random.bernoulli(k2, 0.3, (B, C, H, W)).astype(jnp.float32)

    loss = jax.block_until_ready(dice_focal_loss(p, t))
    ref = jax.block_until_ready(_reference_loss(p, t))

    assert jnp.isfinite(loss), f"non-finite loss: {loss}"
    assert jnp.allclose(loss, ref, rtol=1e-5, atol=1e-5), (loss, ref)
    print("KERNEL_OK")
</pallas_src>

<mosaic_0001>
module attributes {stable_mosaic.version = 11 : i64} {
  func.func @_dice_focal_partial_kernel(%arg0: i32, %arg1: memref<16x128xf32, #tpu.memory_space<vmem>>, %arg2: memref<16x128xf32, #tpu.memory_space<vmem>>, %arg3: memref<4x8x128xf32, #tpu.memory_space<vmem>>) attributes {dimension_semantics = [#tpu.dimension_semantics<arbitrary>], iteration_bounds = array<i64: 1>, scalar_prefetch = 0 : i64, scratch_operands = 0 : i64, tpu.core_type = #tpu.core_type<tc>, window_params = [{transform_indices = @transform_0, window_bounds = array<i64: 16, 128>}, {transform_indices = @transform_1, window_bounds = array<i64: 16, 128>}, {pipeline_mode = #tpu.pipeline_mode<synchronous>, transform_indices = @transform_2, window_bounds = array<i64: 4, 8, 128>}]} {
    %c0_i32 = arith.constant 0 : i32
    %0 = arith.cmpi eq, %arg0, %c0_i32 : i32
    %1 = arith.extui %0 : i1 to i32
    %c0_i32_0 = arith.constant 0 : i32
    %2 = arith.cmpi ne, %1, %c0_i32_0 : i32
    scf.if %2 {
      %cst_40 = arith.constant 0.000000e+00 : f32
      %81 = vector.broadcast %cst_40 : f32 to vector<4x8x128xf32>
      %c0_41 = arith.constant 0 : index
      %c0_42 = arith.constant 0 : index
      %c0_43 = arith.constant 0 : index
      %82 = vector.load %arg3[%c0_41, %c0_42, %c0_43] : memref<4x8x128xf32, #tpu.memory_space<vmem>>, vector<4x8x128xf32>
      tpu.vector_store %arg3[%c0_41, %c0_42, %c0_43], %81 {strides = array<i32>} : memref<4x8x128xf32, #tpu.memory_space<vmem>>, vector<4x8x128xf32>,
    } else {
    }
    %c16_i32 = arith.constant 16 : i32
    %3 = arith.muli %arg0, %c16_i32 : i32
    %4 = tpu.iota {dimensions = array<i32: 0>} : vector<16x128xi32>
    %cst = arith.constant 0.000000e+00 : f32
    %5 = vector.broadcast %cst : f32 to vector<8x128xf32>
    %c0 = arith.constant 0 : index
    %c0_1 = arith.constant 0 : index
    %6 = vector.load %arg1[%c0, %c0_1] : memref<16x128xf32, #tpu.memory_space<vmem>>, vector<16x128xf32>
    %c0_2 = arith.constant 0 : index
    %c0_3 = arith.constant 0 : index
    %7 = vector.load %arg2[%c0_2, %c0_3] : memref<16x128xf32, #tpu.memory_space<vmem>>, vector<16x128xf32>
    %c0_i32_4 = arith.constant 0 : i32
    %8 = arith.addi %3, %c0_i32_4 : i32
    %9 = vector.broadcast %8 : i32 to vector<16x128xi32>
    %10 = arith.addi %9, %4 : vector<16x128xi32>
    %c16_i32_5 = arith.constant 16 : i32
    %11 = vector.broadcast %c16_i32_5 : i32 to vector<16x128xi32>
    %12 = arith.cmpi slt, %10, %11 : vector<16x128xi32>
    %cst_6 = arith.constant -1.000000e+02 : f32
    %13 = vector.broadcast %cst_6 : f32 to vector<16x128xf32>
    %14 = arith.select %12, %6, %13 : vector<16x128xi1>, vector<16x128xf32>
    %cst_7 = arith.constant 0.000000e+00 : f32
    %15 = vector.broadcast %cst_7 : f32 to vector<16x128xf32>
    %16 = arith.select %12, %7, %15 : vector<16x128xi1>, vector<16x128xf32>
    %17 = arith.negf %14 : vector<16x128xf32>
    %18 = math.exp %17 : vector<16x128xf32>
    %cst_8 = arith.constant 1.000000e+00 : f32
    %19 = vector.broadcast %cst_8 : f32 to vector<16x128xf32>
    %20 = arith.addf %19, %18 : vector<16x128xf32>
    %21 = arith.divf %19, %20 : vector<16x128xf32>
    %cst_9 = arith.constant 0.000000e+00 : f32
    %22 = vector.broadcast %cst_9 : f32 to vector<16x128xf32>
    %23 = arith.maximumf %14, %22 : vector<16x128xf32>
    %24 = arith.mulf %14, %16 : vector<16x128xf32>
    %25 = arith.subf %23, %24 : vector<16x128xf32>
    %cst_10 = arith.constant 1.000000e+00 : f32
    %26 = vector.broadcast %cst_10 : f32 to vector<16x128xf32>
    %27 = arith.subf %26, %21 : vector<16x128xf32>
    %28 = arith.maximumf %21, %27 : vector<16x128xf32>
    %29 = math.log %28 : vector<16x128xf32>
    %30 = arith.subf %25, %29 : vector<16x128xf32>
    %31 = arith.mulf %21, %16 : vector<16x128xf32>
    %cst_11 = arith.constant 1.000000e+00 : f32
    %32 = vector.broadcast %cst_11 : f32 to vector<16x128xf32>
    %33 = arith.subf %32, %21 : vector<16x128xf32>
    %cst_12 = arith.constant 1.000000e+00 : f32
    %34 = vector.broadcast %cst_12 : f32 to vector<16x128xf32>
    %35 = arith.subf %34, %16 : vector<16x128xf32>
    %36 = arith.mulf %33, %35 : vector<16x128xf32>
    %37 = arith.addf %31, %36 : vector<16x128xf32>
    %cst_13 = arith.constant 1.000000e+00 : f32
    %38 = vector.broadcast %cst_13 : f32 to vector<16x128xf32>
    %39 = arith.subf %38, %37 : vector<16x128xf32>
    %40 = arith.mulf %39, %39 : vector<16x128xf32>
    %cst_14 = arith.constant 8.000000e-01 : f32
    %41 = vector.broadcast %cst_14 : f32 to vector<16x128xf32>
    %42 = arith.mulf %41, %40 : vector<16x128xf32>
    %43 = arith.mulf %42, %30 : vector<16x128xf32>
    %44 = arith.mulf %21, %16 : vector<16x128xf32>
    %45 = vector.shape_cast %44 : vector<16x128xf32> to vector<2x8x128xf32>
    %cst_15 = arith.constant dense<0.000000e+00> : vector<8x128xf32>
    %46 = vector.multi_reduction <add>, %45, %cst_15 [0] : vector<2x8x128xf32> to vector<8x128xf32>
    %47 = arith.addf %5, %46 : vector<8x128xf32>
    %48 = vector.shape_cast %21 : vector<16x128xf32> to vector<2x8x128xf32>
    %cst_16 = arith.constant dense<0.000000e+00> : vector<8x128xf32>
    %49 = vector.multi_reduction <add>, %48, %cst_16 [0] : vector<2x8x128xf32> to vector<8x128xf32>
    %50 = arith.addf %5, %49 : vector<8x128xf32>
    %51 = vector.shape_cast %16 : vector<16x128xf32> to vector<2x8x128xf32>
    %cst_17 = arith.constant dense<0.000000e+00> : vector<8x128xf32>
    %52 = vector.multi_reduction <add>, %51, %cst_17 [0] : vector<2x8x128xf32> to vector<8x128xf32>
    %53 = arith.addf %5, %52 : vector<8x128xf32>
    %54 = vector.shape_cast %43 : vector<16x128xf32> to vector<2x8x128xf32>
    %cst_18 = arith.constant dense<0.000000e+00> : vector<8x128xf32>
    %55 = vector.multi_reduction <add>, %54, %cst_18 [0] : vector<2x8x128xf32> to vector<8x128xf32>
    %56 = arith.addf %5, %55 : vector<8x128xf32>
    %c0_19 = arith.constant 0 : index
    %c0_20 = arith.constant 0 : index
    %c0_21 = arith.constant 0 : index
    %57 = vector.load %arg3[%c0_19, %c0_20, %c0_21] : memref<4x8x128xf32, #tpu.memory_space<vmem>>, vector<1x8x128xf32>
    %58 = vector.shape_cast %57 : vector<1x8x128xf32> to vector<8x128xf32>
    %59 = arith.addf %58, %47 : vector<8x128xf32>
    %c0_22 = arith.constant 0 : index
    %c0_23 = arith.constant 0 : index
    %c0_24 = arith.constant 0 : index
    %60 = vector.load %arg3[%c0_22, %c0_23, %c0_24] : memref<4x8x128xf32, #tpu.memory_space<vmem>>, vector<1x8x128xf32>
    %61 = vector.shape_cast %60 : vector<1x8x128xf32> to vector<8x128xf32>
    %62 = vector.shape_cast %59 : vector<8x128xf32> to vector<1x8x128xf32>
    tpu.vector_store %arg3[%c0_22, %c0_23, %c0_24], %62 {strides = array<i32>} : memref<4x8x128xf32, #tpu.memory_space<vmem>>, vector<1x8x128xf32>,
    %c1 = arith.constant 1 : index
    %c0_25 = arith.constant 0 : index
    %c0_26 = arith.constant 0 : index
    %63 = vector.load %arg3[%c1, %c0_25, %c0_26] : memref<4x8x128xf32, #tpu.memory_space<vmem>>, vector<1x8x128xf32>
    %64 = vector.shape_cast %63 : vector<1x8x128xf32> to vector<8x128xf32>
    %65 = arith.addf %64, %50 : vector<8x128xf32>
    %c1_27 = arith.constant 1 : index
    %c0_28 = arith.constant 0 : index
    %c0_29 = arith.constant 0 : index
    %66 = vector.load %arg3[%c1_27, %c0_28, %c0_29] : memref<4x8x128xf32, #tpu.memory_space<vmem>>, vector<1x8x128xf32>
    %67 = vector.shape_cast %66 : vector<1x8x128xf32> to vector<8x128xf32>
    %68 = vector.shape_cast %65 : vector<8x128xf32> to vector<1x8x128xf32>
    tpu.vector_store %arg3[%c1_27, %c0_28, %c0_29], %68 {strides = array<i32>} : memref<4x8x128xf32, #tpu.memory_space<vmem>>, vector<1x8x128xf32>,
    %c2 = arith.constant 2 : index
    %c0_30 = arith.constant 0 : index
    %c0_31 = arith.constant 0 : index
    %69 = vector.load %arg3[%c2, %c0_30, %c0_31] : memref<4x8x128xf32, #tpu.memory_space<vmem>>, vector<1x8x128xf32>
    %70 = vector.shape_cast %69 : vector<1x8x128xf32> to vector<8x128xf32>
    %71 = arith.addf %70, %53 : vector<8x128xf32>
    %c2_32 = arith.constant 2 : index
    %c0_33 = arith.constant 0 : index
    %c0_34 = arith.constant 0 : index
    %72 = vector.load %arg3[%c2_32, %c0_33, %c0_34] : memref<4x8x128xf32, #tpu.memory_space<vmem>>, vector<1x8x128xf32>
    %73 = vector.shape_cast %72 : vector<1x8x128xf32> to vector<8x128xf32>
    %74 = vector.shape_cast %71 : vector<8x128xf32> to vector<1x8x128xf32>
    tpu.vector_store %arg3[%c2_32, %c0_33, %c0_34], %74 {strides = array<i32>} : memref<4x8x128xf32, #tpu.memory_space<vmem>>, vector<1x8x128xf32>,
    %c3 = arith.constant 3 : index
    %c0_35 = arith.constant 0 : index
    %c0_36 = arith.constant 0 : index
    %75 = vector.load %arg3[%c3, %c0_35, %c0_36] : memref<4x8x128xf32, #tpu.memory_space<vmem>>, vector<1x8x128xf32>
    %76 = vector.shape_cast %75 : vector<1x8x128xf32> to vector<8x128xf32>
    %77 = arith.addf %76, %56 : vector<8x128xf32>
    %c3_37 = arith.constant 3 : index
    %c0_38 = arith.constant 0 : index
    %c0_39 = arith.constant 0 : index
    %78 = vector.load %arg3[%c3_37, %c0_38, %c0_39] : memref<4x8x128xf32, #tpu.memory_space<vmem>>, vector<1x8x128xf32>
    %79 = vector.shape_cast %78 : vector<1x8x128xf32> to vector<8x128xf32>
    %80 = vector.shape_cast %77 : vector<8x128xf32> to vector<1x8x128xf32>
    tpu.vector_store %arg3[%c3_37, %c0_38, %c0_39], %80 {strides = array<i32>} : memref<4x8x128xf32, #tpu.memory_space<vmem>>, vector<1x8x128xf32>,
    return
  }
  func.func @transform_0(%arg0: i32) -> (i32, i32) {
    %c0_i32 = arith.constant 0 : i32
    %c0_i32_0 = arith.constant 0 : i32
    return %arg0, %c0_i32 : i32, i32
  }
  func.func @transform_1(%arg0: i32) -> (i32, i32) {
    %c0_i32 = arith.constant 0 : i32
    %c0_i32_0 = arith.constant 0 : i32
    return %arg0, %c0_i32 : i32, i32
  }
  func.func @transform_2(%arg0: i32) -> (i32, i32, i32) {
    %c0_i32 = arith.constant 0 : i32
    %c0_i32_0 = arith.constant 0 : i32
    %c0_i32_1 = arith.constant 0 : i32
    %c0_i32_2 = arith.constant 0 : i32
    return %c0_i32, %c0_i32_0, %c0_i32_1 : i32, i32, i32
  }
}

</mosaic_0001>

<llo_original>
// kernel: tpu_custom_call.1
$region0: #{tpu_custom_call.1}
  #allocation0 [shape = 'u32[]', space=smem, size = 0x4, offset = 0x4, fixed_abs, tag = 'smem constant byte address 0x4 - core index']
  #allocation1 [shape = 'u32[144,128]{1,0:T(1,128)}', space=vmem, size = 0x12000, scoped, tag = 'internal scratch']
  %s0 = inlined_call_operand.hbm [shape: f32[16,128], index: 0, kind: input, shape index: {}]
  %s1 = inlined_call_operand.hbm [shape: f32[16,128], index: 1, kind: input, shape index: {}]
  %s2 = inlined_call_operand.hbm [shape: f32[4,8,128], index: 2, kind: output, shape index: {}]
  %s3 = sld [smem:[#allocation0]]
  $region30: #{tpu_custom_call.1} parent=0
    _
  %s5 = ssub.s32 1, %s3
  %s6 = scalar_select 0, %s5, %s3
  $region1: #{tpu_custom_call.1} parent=0
    #allocation2 [shape = 'u8[8192]{0}', space=vmem, size = 0x2000, scoped, tag = 'input window, operand 0, single buffered']
    #allocation3 [shape = 's32[1]{0}', space=sflag, size = 0x4, scoped, tag = 'scoped memory for tpu_custom_call.1']
    #allocation4 [shape = 's32[1]{0}', space=sflag, size = 0x4, scoped, tag = 'scoped memory for tpu_custom_call.1']
    #allocation5 [shape = 'u8[8192]{0}', space=vmem, size = 0x2000, scoped, tag = 'input window, operand 1, single buffered']
    #allocation6 [shape = 's32[1]{0}', space=sflag, size = 0x4, scoped, tag = 'scoped memory for tpu_custom_call.1']
    #allocation7 [shape = 'u8[16384]{0}', space=vmem, size = 0x4000, scoped, tag = 'output window, operand 0, single buffered']
    %7 = vsyncpa [#allocation3], 0
    %8 = vsyncpa [#allocation6], 0
    %9 = vsyncpa [#allocation4], 0
    // Predicated region
    $region2: #{tpu_custom_call.1} parent=1 // pred_check
      _
    $region3: #{tpu_custom_call.1} parent=1 // pred_check_branch
      %11 = sbr.rel (0) target = $region5
    $region4: #{tpu_custom_call.1} parent=1 // pred_region
      %s13 = ssub.s32 256, 256
      %14 = vsyncadd [#allocation3], %s13
      %s15 = sshll.u32 [#allocation2], 4
      %s16 = int_to_ptr.vmem [resolvable:$true] %s15
      %21 = dma.hbm_to_vmem [thread:$0]  %s0, 256, %s16, [#allocation3], 128, 128, 8
    $region5: #{tpu_custom_call.1} parent=1 // pred_fallthru
      _
    // Predicated region
    $region6: #{tpu_custom_call.1} parent=1 // pred_check
      _
    $region7: #{tpu_custom_call.1} parent=1 // pred_check_branch
      %23 = sbr.rel (0) target = $region9
    $region8: #{tpu_custom_call.1} parent=1 // pred_region
      %s25 = ssub.s32 256, 256
      %26 = vsyncadd [#allocation6], %s25
      %s27 = sshll.u32 [#allocation5], 4
      %s28 = int_to_ptr.vmem [resolvable:$true] %s27
      %33 = dma.hbm_to_vmem [thread:$0]  %s1, 256, %s28, [#allocation6], 128, 128, 8
    $region9: #{tpu_custom_call.1} parent=1 // pred_fallthru
      _
    // Predicated region
    $region10: #{tpu_custom_call.1} parent=1 // pred_check
      _
    $region11: #{tpu_custom_call.1} parent=1 // pred_check_branch
      %35 = sbr.rel (0) target = $region13
    $region12: #{tpu_custom_call.1} parent=1 // pred_region
      %36 = dma.done [#allocation3], 256
    $region13: #{tpu_custom_call.1} parent=1 // pred_fallthru
      _
    // Predicated region
    $region14: #{tpu_custom_call.1} parent=1 // pred_check
      _
    $region15: #{tpu_custom_call.1} parent=1 // pred_check_branch
      %38 = sbr.rel (0) target = $region17
    $region16: #{tpu_custom_call.1} parent=1 // pred_region
      %39 = dma.done [#allocation6], 256
    $region17: #{tpu_custom_call.1} parent=1 // pred_fallthru
      _
    %p40 = scmp.eq.s32.totalorder 0, 0
    // Predicated region
    $region18: #{tpu_custom_call.1} parent=1 // pred_check
      %p41 = pneg %p40
    $region19: #{tpu_custom_call.1} parent=1 // pred_check_branch
      %43 = sbr.rel (%p41) target = $region21
    $region20: #{tpu_custom_call.1} parent=1 // pred_region
      %44 = vst [vmem:[#allocation7] sm:$0xff] 0.0
      %45 = vst [vmem:[#allocation7 + $0x8] sm:$0xff] 0.0
      %46 = vst [vmem:[#allocation7 + $0x10] sm:$0xff] 0.0
      %47 = vst [vmem:[#allocation7 + $0x18] sm:$0xff] 0.0
    $region21: #{tpu_custom_call.1} parent=1 // pred_fallthru
      _
    %s48 = smul.u32 0, 16
    %v49 = vlaneseq
    %v50 = vshrl.u32 %v49, 7
    %v51 = vadd.s32 %v50, 8
    %v52 = vld [vmem:[#allocation2] sm:$0xff]
    %v53 = vld [vmem:[#allocation2 + $0x8] sm:$0xff]
    %v54 = vld [vmem:[#allocation5] sm:$0xff]
    %v55 = vld [vmem:[#allocation5 + $0x8] sm:$0xff]
    %v56 = vstv %s48
    %v57 = vadd.s32 %v56, %v50
    %v58 = vadd.s32 %v56, %v51
    %vm59 = vcmp.lt.s32.totalorder %v57, 16
    %vm60 = vcmp.lt.s32.totalorder %v58, 16
    %v61 = vsel %vm59, %v52, -100.0
    %v62 = vsel %vm60, %v53, -100.0
    %v63 = vsel %vm59, %v54, 0.0
    %v64 = vsel %vm60, %v55, 0.0
    %v65 = vxor.u32 %v61, 2147483648
    %v66 = vxor.u32 %v62, 2147483648
    %v67 = vmul.f32 %v65, 1.442695
    %v68 = vpow.pop %v67
    %v69 = vmul.f32 %v66, 1.442695
    %v70 = vpow.pop %v69
    %v71 = vadd.f32 %v68, 1.0
    %v72 = vadd.f32 %v70, 1.0
    %v73 = vrcp.pop %v71
    %v74 = vmul.f32 1.0, %v73
    %v75 = vrcp.pop %v72
    %v76 = vmul.f32 1.0, %v75
    %v77 = vmax.f32 %v61, 0.0
    %v78 = vmax.f32 %v62, 0.0
    %v79 = vmul.f32 %v61, %v63
    %v80 = vmul.f32 %v62, %v64
    %v81 = vsub.f32 %v77, %v79
    %v82 = vsub.f32 %v78, %v80
    %v83 = vsub.f32 1.0, %v74
    %v84 = vsub.f32 1.0, %v76
    %v85 = vmax.f32 %v74, %v83
    %v86 = vmax.f32 %v76, %v84
    %v87 = vlog2.pop %v85
    %v88 = vmul.f32 %v87, 0.6931472
    %v89 = vlog2.pop %v86
    %v90 = vmul.f32 %v89, 0.6931472
    %v91 = vsub.f32 %v81, %v88
    %v92 = vsub.f32 %v82, %v90
    %v93 = vmul.f32 %v74, %v63
    %v94 = vmul.f32 %v76, %v64
    %v95 = vsub.f32 1.0, %v63
    %v96 = vsub.f32 1.0, %v64
    %v97 = vmul.f32 %v83, %v95
    %v98 = vmul.f32 %v84, %v96
    %v99 = vadd.f32 %v93, %v97
    %v100 = vadd.f32 %v94, %v98
    %v101 = vsub.f32 1.0, %v99
    %v102 = vsub.f32 1.0, %v100
    %v103 = vmul.f32 %v101, %v101
    %v104 = vmul.f32 %v102, %v102
    %v105 = vmul.f32 %v103, 0.8
    %v106 = vmul.f32 %v104, 0.8
    %v107 = vmul.f32 %v105, %v91
    %v108 = vmul.f32 %v106, %v92
    %v109 = vadd.f32 %v93, %v94
    %v110 = vadd.f32 %v109, 0.0
    %v111 = vadd.f32 %v74, %v76
    %v112 = vadd.f32 %v111, 0.0
    %v113 = vadd.f32 %v63, %v64
    %v114 = vadd.f32 %v113, 0.0
    %v115 = vadd.f32 %v107, %v108
    %v116 = vadd.f32 %v115, 0.0
    %v117 = vld [vmem:[#allocation7] sm:$0xff]
    %v118 = vadd.f32 %v117, %v110
    %119 = vst [vmem:[#allocation7] sm:$0xff] %v118
    %s120 = scalar_lea.vmem [#allocation7], 8
    %v121 = vld [vmem:[%s120] sm:$0xff]
    %v122 = vadd.f32 %v121, %v112
    %123 = vst [vmem:[%s120] sm:$0xff] %v122
    %s124 = scalar_lea.vmem [#allocation7], 16
    %v125 = vld [vmem:[%s124] sm:$0xff]
    %v126 = vadd.f32 %v125, %v114
    %127 = vst [vmem:[%s124] sm:$0xff] %v126
    %s128 = scalar_lea.vmem [#allocation7], 24
    %v129 = vld [vmem:[%s128] sm:$0xff]
    %v130 = vadd.f32 %v129, %v116
    %131 = vst [vmem:[%s128] sm:$0xff] %v130
    // Predicated region
    $region22: #{tpu_custom_call.1} parent=1 // pred_check
      _
    $region23: #{tpu_custom_call.1} parent=1 // pred_check_branch
      %133 = sbr.rel (0) target = $region25
    $region24: #{tpu_custom_call.1} parent=1 // pred_region
      %s135 = ssub.s32 512, 512
      %136 = vsyncadd [#allocation4], %s135
      %s137 = sshll.u32 [#allocation7], 4
      %s138 = int_to_ptr.vmem [resolvable:$true] %s137
      %143 = dma.vmem_to_hbm [thread:$0]  %s138, 512, %s2, [#allocation4], 128, 128, 8
    $region25: #{tpu_custom_call.1} parent=1 // pred_fallthru
      _
    // Predicated region
    $region26: #{tpu_custom_call.1} parent=1 // pred_check
      _
    $region27: #{tpu_custom_call.1} parent=1 // pred_check_branch
      %145 = sbr.rel (0) target = $region29
    $region28: #{tpu_custom_call.1} parent=1 // pred_region
      %146 = dma.done [#allocation4], 512
    $region29: #{tpu_custom_call.1} parent=1 // pred_fallthru
      _
    %147 = vsyncpa [#allocation3], 1
    %148 = vsyncpa [#allocation6], 1
    %149 = vsyncpa [#allocation4], 1

</llo_original>
